<compile_context>
chip_gen: v7x
topology: tpu7x:2x2x1
jax: 0.10.0
libtpu: 0.0.40
codegen_flags: <defaults>
</compile_context>

<pallas_src>
import functools

import jax
import jax.numpy as jnp
from jax.experimental import pallas as pl
from jax.experimental.pallas import tpu as pltpu

_LANE = 128


def _round_up(x, m):
    return ((x + m - 1) // m) * m


def _pad2(a, rows, cols):
    return jnp.pad(a, ((0, rows - a.shape[0]), (0, cols - a.shape[1])))


def _device_kind():
    try:
        return jax.devices()[0].device_kind.lower()
    except Exception:
        return ""


def _tile_target(kind):
    # Measured: 512-1024 tiles reach 85%+ of HBM roofline vs ~29% at 128.
    if "v7" in kind or "v6" in kind or "v5" in kind:
        return 1024
    return 512


def _vmem_limit(kind):
    if "v7" in kind:
        return 48 * 1024 * 1024      # 64 MiB physical; leave headroom
    if "v6" in kind or "v5" in kind:
        return 64 * 1024 * 1024      # 128 MiB physical
    return 32 * 1024 * 1024


def _cores_per_chip(kind):
    return 2 if "v7" in kind else 1  # v7x has 2 TensorCores per chip


def _select_tiling(n, target, cores):
    """Pick (n_pad, tm, tk): tiles as large as possible without inflating A by >~12.5% rows."""
    base = _round_up(n, _LANE)
    tile = _LANE
    t = min(target, base)
    t -= t % _LANE
    while t >= _LANE:
        if _round_up(n, t) * 8 <= base * 9:   # <= 12.5% extra rows of padding
            tile = t
            break
        t -= _LANE
    n_pad = _round_up(n, tile)
    tm = tk = tile
    # v7x megacore: ensure the "parallel" row axis has >= 2 grid steps when cheap to do so.
    if cores > 1 and n_pad // tm < cores:
        half = tm // 2
        if half >= _LANE and half % _LANE == 0 and n_pad % half == 0:
            tm = half
    return n_pad, tm, tk


# ----------------------------------------------------------------------------
# Kernel 1: tiled aggregation  acc = A @ H ; optional fused epilogue
#           o = relu(acc @ W + b)   (fuse_w)   or   o = relu(acc + b)
# ----------------------------------------------------------------------------
def _agg_kernel(a_ref, h_ref, *rest, fuse_w, fuse_bias_relu):
    idx = 0
    w_ref = None
    b_ref = None
    if fuse_w:
        w_ref = rest[idx]
        idx += 1
    if fuse_bias_relu:
        b_ref = rest[idx]
        idx += 1
    o_ref = rest[idx]
    acc_ref = rest[idx + 1]

    k = pl.program_id(1)

    @pl.when(k == 0)
    def _():
        acc_ref[...] = jnp.zeros_like(acc_ref)

    acc_ref[...] += jnp.dot(a_ref[...], h_ref[...],
                            preferred_element_type=jnp.float32)

    @pl.when(k == pl.num_programs(1) - 1)
    def _():
        acc = acc_ref[...]
        if fuse_w:
            acc = jnp.dot(acc.astype(w_ref.dtype), w_ref[...],
                          preferred_element_type=jnp.float32)
        if fuse_bias_relu:
            acc = jnp.maximum(acc + b_ref[...], 0.0)
        o_ref[...] = acc.astype(o_ref.dtype)


def aggregate(a, h, *, w=None, bias=None, out_dtype, tm, tk, vmem_limit):
    """A:(N,N) bf16, H:(N,F_in) bf16 -> (N,F_out).
    w given  => fused epilogue (A@H) @ W; bias given => fused + bias + ReLU."""
    n = a.shape[0]
    f_in = h.shape[1]
    f_out = w.shape[1] if w is not None else f_in
    assert n % tm == 0 and n % tk == 0
    fuse_w = w is not None
    fuse_br = bias is not None

    in_specs = [
        pl.BlockSpec((tm, tk), lambda i, k: (i, k)),
        pl.BlockSpec((tk, f_in), lambda i, k: (k, 0)),
    ]
    args = [a, h]
    if fuse_w:
        in_specs.append(pl.BlockSpec((f_in, f_out), lambda i, k: (0, 0)))
        args.append(w)
    if fuse_br:
        in_specs.append(pl.BlockSpec((1, f_out), lambda i, k: (0, 0)))
        args.append(bias)

    row_tiles = n // tm
    out_bytes = n * f_out * jnp.dtype(out_dtype).itemsize
    flops = 2 * n * n * f_in + (2 * n * f_in * f_out if fuse_w else 0)
    bytes_accessed = (a.size * a.dtype.itemsize
                      + row_tiles * h.size * h.dtype.itemsize   # H re-streamed per row tile
                      + (w.size * w.dtype.itemsize if fuse_w else 0)
                      + (bias.size * bias.dtype.itemsize if fuse_br else 0)
                      + out_bytes)
    cost = pl.CostEstimate(flops=int(flops), transcendentals=0,
                           bytes_accessed=int(bytes_accessed))

    return pl.pallas_call(
        functools.partial(_agg_kernel, fuse_w=fuse_w, fuse_bias_relu=fuse_br),
        out_shape=jax.ShapeDtypeStruct((n, f_out), out_dtype),
        grid_spec=pltpu.PrefetchScalarGridSpec(
            num_scalar_prefetch=0,
            grid=(n // tm, n // tk),                # reduction axis last
            in_specs=in_specs,
            out_specs=pl.BlockSpec((tm, f_out), lambda i, k: (i, 0)),
            scratch_shapes=[pltpu.VMEM((tm, f_in), jnp.float32)],
        ),
        compiler_params=pltpu.CompilerParams(
            dimension_semantics=("parallel", "arbitrary"),
            vmem_limit_bytes=vmem_limit,
        ),
        cost_estimate=cost,
    )(*args)


# ----------------------------------------------------------------------------
# Kernel 2: row-tiled feature transform  out = X @ W   (used when F_in > F_out)
# ----------------------------------------------------------------------------
def _transform_kernel(x_ref, w_ref, o_ref):
    h = jnp.dot(x_ref[...], w_ref[...], preferred_element_type=jnp.float32)
    o_ref[...] = h.astype(o_ref.dtype)


def transform(x, w, *, out_dtype, tm, vmem_limit):
    n, f_in = x.shape
    f_out = w.shape[1]
    assert n % tm == 0

    cost = pl.CostEstimate(
        flops=int(2 * n * f_in * f_out),
        transcendentals=0,
        bytes_accessed=int(x.size * x.dtype.itemsize + w.size * w.dtype.itemsize
                           + n * f_out * jnp.dtype(out_dtype).itemsize),
    )

    return pl.pallas_call(
        _transform_kernel,
        out_shape=jax.ShapeDtypeStruct((n, f_out), out_dtype),
        grid_spec=pltpu.PrefetchScalarGridSpec(
            num_scalar_prefetch=0,
            grid=(n // tm,),
            in_specs=[pl.BlockSpec((tm, f_in), lambda i: (i, 0)),
                      pl.BlockSpec((f_in, f_out), lambda i: (0, 0))],
            out_specs=pl.BlockSpec((tm, f_out), lambda i: (i, 0)),
            scratch_shapes=[],
        ),
        compiler_params=pltpu.CompilerParams(
            dimension_semantics=("parallel",),
            vmem_limit_bytes=vmem_limit,
        ),
        cost_estimate=cost,
    )(x, w)


# ----------------------------------------------------------------------------
# Kernel 3: whole-model fusion for small graphs — A resident in VMEM across layers
# ----------------------------------------------------------------------------
def _fused_gcn_kernel(a_ref, x_ref, w_ref, b_ref, o_ref, *, num_layers):
    a = a_ref[...]                      # (n_pad, n_pad) bf16, loaded once
    h = x_ref[...]                      # (n_pad, f_pad)  bf16
    for layer in range(num_layers):     # static unroll
        xw = jnp.dot(h, w_ref[layer], preferred_element_type=jnp.float32)
        agg = jnp.dot(a, xw.astype(a.dtype), preferred_element_type=jnp.float32)
        h = jnp.maximum(agg + b_ref[layer], 0.0)
        if layer + 1 < num_layers:
            h = h.astype(x_ref.dtype)
    o_ref[...] = h.astype(o_ref.dtype)


def fused_gcn(a, x, w_stack, b_stack, *, vmem_limit):
    n_pad = a.shape[0]
    f_pad = x.shape[1]
    num_layers = w_stack.shape[0]

    flops = num_layers * (2 * n_pad * f_pad * f_pad + 2 * n_pad * n_pad * f_pad)
    bytes_accessed = (a.size * a.dtype.itemsize + x.size * x.dtype.itemsize
                      + w_stack.size * w_stack.dtype.itemsize
                      + b_stack.size * b_stack.dtype.itemsize
                      + n_pad * f_pad * 4)
    cost = pl.CostEstimate(flops=int(flops), transcendentals=0,
                           bytes_accessed=int(bytes_accessed))

    vmem_spec = pl.BlockSpec(memory_space=pltpu.MemorySpace.VMEM)
    return pl.pallas_call(
        functools.partial(_fused_gcn_kernel, num_layers=num_layers),
        out_shape=jax.ShapeDtypeStruct((n_pad, f_pad), jnp.float32),
        in_specs=[vmem_spec, vmem_spec, vmem_spec, vmem_spec],
        out_specs=vmem_spec,
        compiler_params=pltpu.CompilerParams(vmem_limit_bytes=vmem_limit),
        cost_estimate=cost,
    )(a, x, w_stack, b_stack)


def _fused_fits(n_pad, f_pad, num_layers, vmem_limit):
    if n_pad > 4096:
        return False
    need = (n_pad * n_pad * 2                     # A bf16
            + n_pad * f_pad * 2                   # X bf16
            + num_layers * f_pad * f_pad * 2      # weights bf16
            + num_layers * f_pad * 4              # biases f32
            + n_pad * f_pad * 4                   # f32 output
            + 6 * n_pad * f_pad * 4)              # headroom for f32 intermediates
    return need <= (vmem_limit * 7) // 10


# ----------------------------------------------------------------------------
# Glue (plain JAX): edge_index -> dense normalized adjacency, model wrapper
# ----------------------------------------------------------------------------
def build_normalized_adjacency(edge_index, num_nodes):
    """Dense D^-1/2 (A + I) D^-1/2 matching PyG GCNConv normalization."""
    # TODO(synk): block-sparse aggregation via scalar prefetch for genuinely sparse graphs;
    # the scatter-add adjacency build stays in plain JAX (dynamic indices).
    src = edge_index[0]
    dst = edge_index[1]
    a = jnp.zeros((num_nodes, num_nodes), dtype=jnp.float32)
    a = a.at[dst, src].add(1.0)                         # message flows src -> dst
    a = a + jnp.eye(num_nodes, dtype=jnp.float32)       # self loops
    deg = a.sum(axis=1)
    dinv = jnp.where(deg > 0, 1.0 / jnp.sqrt(deg), 0.0)
    return dinv[:, None] * a * dinv[None, :]


class GNNNetPallas:
    """JAX/Pallas re-implementation of GNNNet.forward."""

    def __init__(self, input_dim, hidden_dim, layers, key):
        dims = [input_dim] + [hidden_dim] * layers
        self.hidden_dim = hidden_dim
        self.params = []
        for i in range(layers):
            key, wk = jax.random.split(key)
            fan_in, fan_out = dims[i], dims[i + 1]
            limit = (6.0 / (fan_in + fan_out)) ** 0.5      # Glorot-uniform, zero bias
            w = jax.random.uniform(wk, (fan_in, fan_out), jnp.float32,
                                   minval=-limit, maxval=limit)
            b = jnp.zeros((1, fan_out), dtype=jnp.float32)
            self.params.append((w, b))

    def __call__(self, x, edge_index, *, use_fused=True):
        n = x.shape[0]
        num_layers = len(self.params)
        a_norm = build_normalized_adjacency(edge_index, n)

        kind = _device_kind()
        vmem_limit = _vmem_limit(kind)
        dims = [self.params[0][0].shape[0]] + [w.shape[1] for w, _ in self.params]
        f_pad = max(_round_up(d, _LANE) for d in dims)
        n_pad128 = _round_up(n, _LANE)

        # ---- Path A: whole-model fusion, A resident in VMEM across all layers ----
        if use_fused and _fused_fits(n_pad128, f_pad, num_layers, vmem_limit):
            a_pad = _pad2(a_norm, n_pad128, n_pad128).astype(jnp.bfloat16)
            x_pad = _pad2(x.astype(jnp.float32), n_pad128, f_pad).astype(jnp.bfloat16)
            w_stack = jnp.stack([_pad2(w, f_pad, f_pad).astype(jnp.bfloat16)
                                 for w, _ in self.params])
            b_stack = jnp.stack([_pad2(b, 1, f_pad) for _, b in self.params])
            out = fused_gcn(a_pad, x_pad, w_stack, b_stack, vmem_limit=vmem_limit)
            return out[:n, :self.hidden_dim]

        # ---- Path B: tiled per-layer kernels (large graphs) ----
        target = _tile_target(kind)
        cores = _cores_per_chip(kind)
        n_pad, tm, tk = _select_tiling(n, target, cores)

        a_pad = _pad2(a_norm, n_pad, n_pad).astype(jnp.bfloat16)   # built & cast once
        h = _pad2(x.astype(jnp.float32), n_pad,
                  _round_up(dims[0], _LANE)).astype(jnp.bfloat16)  # padded bf16 activations

        for li, (w, b) in enumerate(self.params):
            f_in, f_out = w.shape
            f_in_pad = _round_up(f_in, _LANE)
            f_out_pad = _round_up(f_out, _LANE)
            w_pad = _pad2(w, f_in_pad, f_out_pad).astype(jnp.bfloat16)
            b_pad = _pad2(b, 1, f_out_pad)                         # stays f32
            out_dtype = jnp.float32 if li == num_layers - 1 else jnp.bfloat16

            if f_in <= f_out:
                # Aggregate in the narrower space with W/bias/ReLU fused into the epilogue.
                h = aggregate(a_pad, h, w=w_pad, bias=b_pad, out_dtype=out_dtype,
                              tm=tm, tk=tk, vmem_limit=vmem_limit)
            else:
                # Transform into the narrower space first, then aggregate + bias + ReLU.
                xw = transform(h, w_pad, out_dtype=jnp.bfloat16, tm=tm,
                               vmem_limit=vmem_limit)
                h = aggregate(a_pad, xw, bias=b_pad, out_dtype=out_dtype,
                              tm=tm, tk=tk, vmem_limit=vmem_limit)

        return h[:n, :self.hidden_dim]


def _reference_forward(x, a_norm, params):
    for w, b in params:
        x = jnp.maximum(a_norm @ (x @ w) + b, 0.0)
    return x


if __name__ == "__main__":
    key = jax.random.PRNGKey(0)

    num_nodes = 16
    input_dim = 8
    hidden_dim = 32
    num_layers = 3

    k_x, k_model = jax.random.split(key)
    x = jax.random.normal(k_x, (num_nodes, input_dim), dtype=jnp.float32)

    # Simple bidirectional ring graph: i <-> (i+1) mod N
    i = jnp.arange(num_nodes, dtype=jnp.int32)
    j = (i + 1) % num_nodes
    edge_index = jnp.stack(
        [jnp.concatenate([i, j]), jnp.concatenate([j, i])], axis=0
    )  # (2, 2N)

    model = GNNNetPallas(input_dim, hidden_dim, num_layers, k_model)
    ref = _reference_forward(
        x, build_normalized_adjacency(edge_index, num_nodes), model.params
    )

    # Path A: fused whole-model kernel (A resident in VMEM).
    fwd_fused = jax.jit(lambda xx, ee: model(xx, ee, use_fused=True))
    out_fused = fwd_fused(x, edge_index)
    jax.block_until_ready(out_fused)

    # Path B: tiled per-layer kernels (the large-graph code path).
    fwd_tiled = jax.jit(lambda xx, ee: model(xx, ee, use_fused=False))
    out_tiled = fwd_tiled(x, edge_index)
    jax.block_until_ready(out_tiled)

    for out in (out_fused, out_tiled):
        assert out.shape == (num_nodes, hidden_dim)
        assert bool(jnp.all(out >= 0.0))            # ReLU output
        assert bool(jnp.all(jnp.isfinite(out)))
        # bf16 matmul inputs / f32 accumulation: validate against an f32 reference.
        assert bool(jnp.allclose(out, ref, rtol=1e-1, atol=1e-1)), float(
            jnp.max(jnp.abs(out - ref))
        )

    print("KERNEL_OK")
</pallas_src>

<mosaic_0001>
module attributes {stable_mosaic.version = 11 : i64} {
  func.func private @main(%arg0: i32) attributes {dimension_semantics = [#tpu.dimension_semantics<core_parallel>], iteration_bounds = array<i64: 2>, tpu.core_type = #tpu.core_type<sc_scalar_subcore>, window_params = []} {
    return
  }
}

module attributes {stable_mosaic.version = 11 : i64} {
  func.func private @main(%arg0: i32) attributes {dimension_semantics = [#tpu.dimension_semantics<core_parallel>], iteration_bounds = array<i64: 2>, tpu.core_type = #tpu.core_type<sc_scalar_subcore>, window_params = []} {
    return
  }
}

module attributes {stable_mosaic.version = 11 : i64} {
  func.func @_fused_gcn_kernel(%arg0: memref<128x128xbf16, #tpu.memory_space<vmem>>, %arg1: memref<128x128xbf16, #tpu.memory_space<vmem>>, %arg2: memref<3x128x128xbf16, #tpu.memory_space<vmem>>, %arg3: memref<3x1x128xf32, #tpu.memory_space<vmem>>, %arg4: memref<128x128xf32, #tpu.memory_space<vmem>>) attributes {dimension_semantics = [], scalar_prefetch = 0 : i64, scratch_operands = 0 : i64, tpu.core_type = #tpu.core_type<tc>} {
    %c0 = arith.constant 0 : index
    %c0_0 = arith.constant 0 : index
    %0 = vector.load %arg0[%c0, %c0_0] : memref<128x128xbf16, #tpu.memory_space<vmem>>, vector<128x128xbf16>
    %c0_1 = arith.constant 0 : index
    %c0_2 = arith.constant 0 : index
    %1 = vector.load %arg1[%c0_1, %c0_2] : memref<128x128xbf16, #tpu.memory_space<vmem>>, vector<128x128xbf16>
    %c0_3 = arith.constant 0 : index
    %c0_4 = arith.constant 0 : index
    %c0_5 = arith.constant 0 : index
    %2 = vector.load %arg2[%c0_3, %c0_4, %c0_5] : memref<3x128x128xbf16, #tpu.memory_space<vmem>>, vector<1x128x128xbf16>
    %3 = vector.shape_cast %2 : vector<1x128x128xbf16> to vector<128x128xbf16>
    %cst = arith.constant dense<0.000000e+00> : vector<128x128xf32>
    %4 = tpu.matmul %1, %3, %cst {dimension_numbers = #tpu.dot_dimension_numbers<[1], [0], [0], [1], [0, 0, 1, 1], [], []>} : vector<128x128xbf16>, vector<128x128xbf16>, vector<128x128xf32> -> vector<128x128xf32>
    %5 = arith.truncf %4 : vector<128x128xf32> to vector<128x128xbf16>
    %cst_6 = arith.constant dense<0.000000e+00> : vector<128x128xf32>
    %6 = tpu.matmul %0, %5, %cst_6 {dimension_numbers = #tpu.dot_dimension_numbers<[1], [0], [0], [1], [0, 0, 1, 1], [], []>} : vector<128x128xbf16>, vector<128x128xbf16>, vector<128x128xf32> -> vector<128x128xf32>
    %c0_7 = arith.constant 0 : index
    %c0_8 = arith.constant 0 : index
    %c0_9 = arith.constant 0 : index
    %7 = vector.load %arg3[%c0_7, %c0_8, %c0_9] : memref<3x1x128xf32, #tpu.memory_space<vmem>>, vector<1x1x128xf32>
    %8 = vector.shape_cast %7 : vector<1x1x128xf32> to vector<1x128xf32>
    %9 = vector.broadcast %8 : vector<1x128xf32> to vector<128x128xf32>
    %10 = arith.addf %6, %9 : vector<128x128xf32>
    %cst_10 = arith.constant 0.000000e+00 : f32
    %11 = vector.broadcast %cst_10 : f32 to vector<128x128xf32>
    %12 = arith.maximumf %10, %11 : vector<128x128xf32>
    %13 = arith.truncf %12 : vector<128x128xf32> to vector<128x128xbf16>
    %c1 = arith.constant 1 : index
    %c0_11 = arith.constant 0 : index
    %c0_12 = arith.constant 0 : index
    %14 = vector.load %arg2[%c1, %c0_11, %c0_12] : memref<3x128x128xbf16, #tpu.memory_space<vmem>>, vector<1x128x128xbf16>
    %15 = vector.shape_cast %14 : vector<1x128x128xbf16> to vector<128x128xbf16>
    %cst_13 = arith.constant dense<0.000000e+00> : vector<128x128xf32>
    %16 = tpu.matmul %13, %15, %cst_13 {dimension_numbers = #tpu.dot_dimension_numbers<[1], [0], [0], [1], [0, 0, 1, 1], [], []>} : vector<128x128xbf16>, vector<128x128xbf16>, vector<128x128xf32> -> vector<128x128xf32>
    %17 = arith.truncf %16 : vector<128x128xf32> to vector<128x128xbf16>
    %cst_14 = arith.constant dense<0.000000e+00> : vector<128x128xf32>
    %18 = tpu.matmul %0, %17, %cst_14 {dimension_numbers = #tpu.dot_dimension_numbers<[1], [0], [0], [1], [0, 0, 1, 1], [], []>} : vector<128x128xbf16>, vector<128x128xbf16>, vector<128x128xf32> -> vector<128x128xf32>
    %c1_15 = arith.constant 1 : index
    %c0_16 = arith.constant 0 : index
    %c0_17 = arith.constant 0 : index
    %19 = vector.load %arg3[%c1_15, %c0_16, %c0_17] : memref<3x1x128xf32, #tpu.memory_space<vmem>>, vector<1x1x128xf32>
    %20 = vector.shape_cast %19 : vector<1x1x128xf32> to vector<1x128xf32>
    %21 = vector.broadcast %20 : vector<1x128xf32> to vector<128x128xf32>
    %22 = arith.addf %18, %21 : vector<128x128xf32>
    %cst_18 = arith.constant 0.000000e+00 : f32
    %23 = vector.broadcast %cst_18 : f32 to vector<128x128xf32>
    %24 = arith.maximumf %22, %23 : vector<128x128xf32>
    %25 = arith.truncf %24 : vector<128x128xf32> to vector<128x128xbf16>
    %c2 = arith.constant 2 : index
    %c0_19 = arith.constant 0 : index
    %c0_20 = arith.constant 0 : index
    %26 = vector.load %arg2[%c2, %c0_19, %c0_20] : memref<3x128x128xbf16, #tpu.memory_space<vmem>>, vector<1x128x128xbf16>
    %27 = vector.shape_cast %26 : vector<1x128x128xbf16> to vector<128x128xbf16>
    %cst_21 = arith.constant dense<0.000000e+00> : vector<128x128xf32>
    %28 = tpu.matmul %25, %27, %cst_21 {dimension_numbers = #tpu.dot_dimension_numbers<[1], [0], [0], [1], [0, 0, 1, 1], [], []>} : vector<128x128xbf16>, vector<128x128xbf16>, vector<128x128xf32> -> vector<128x128xf32>
    %29 = arith.truncf %28 : vector<128x128xf32> to vector<128x128xbf16>
    %cst_22 = arith.constant dense<0.000000e+00> : vector<128x128xf32>
    %30 = tpu.matmul %0, %29, %cst_22 {dimension_numbers = #tpu.dot_dimension_numbers<[1], [0], [0], [1], [0, 0, 1, 1], [], []>} : vector<128x128xbf16>, vector<128x128xbf16>, vector<128x128xf32> -> vector<128x128xf32>
    %c2_23 = arith.constant 2 : index
    %c0_24 = arith.constant 0 : index
    %c0_25 = arith.constant 0 : index
    %31 = vector.load %arg3[%c2_23, %c0_24, %c0_25] : memref<3x1x128xf32, #tpu.memory_space<vmem>>, vector<1x1x128xf32>
    %32 = vector.shape_cast %31 : vector<1x1x128xf32> to vector<1x128xf32>
    %33 = vector.broadcast %32 : vector<1x128xf32> to vector<128x128xf32>
    %34 = arith.addf %30, %33 : vector<128x128xf32>
    %cst_26 = arith.constant 0.000000e+00 : f32
    %35 = vector.broadcast %cst_26 : f32 to vector<128x128xf32>
    %36 = arith.maximumf %34, %35 : vector<128x128xf32>
    %c0_27 = arith.constant 0 : index
    %c0_28 = arith.constant 0 : index
    %37 = vector.load %arg4[%c0_27, %c0_28] : memref<128x128xf32, #tpu.memory_space<vmem>>, vector<128x128xf32>
    tpu.vector_store %arg4[%c0_27, %c0_28], %36 {strides = array<i32>} : memref<128x128xf32, #tpu.memory_space<vmem>>, vector<128x128xf32>,
    return
  }
}

</mosaic_0001>

<llo_original>
// kernel: _lambda_.1
$region0: #{_lambda_.1}
  #allocation0 [shape = 'u32[]', space=smem, size = 0x4, offset = 0x4, fixed_abs, tag = 'smem constant byte address 0x4 - core index']
  #allocation1 [shape = 'u32[144,128]{1,0:T(1,128)}', space=vmem, size = 0x12000, scoped, tag = 'internal scratch']
  %s0 = inlined_call_operand.vmem [shape: bf16[128,128], index: 0, kind: input, shape index: {}]
  %s1 = inlined_call_operand.vmem [shape: bf16[128,128], index: 1, kind: input, shape index: {}]
  %s2 = inlined_call_operand.vmem [shape: bf16[3,128,128], index: 2, kind: input, shape index: {}]
  %s3 = inlined_call_operand.vmem [shape: f32[3,1,128], index: 3, kind: input, shape index: {}]
  %s4 = inlined_call_operand.vmem [shape: f32[128,128], index: 4, kind: output, shape index: {}]
  %s5 = sld [smem:[#allocation0]]
  $region26: #{_lambda_.1} parent=0
    _
  %s7 = ssub.s32 1, %s5
  %s8 = scalar_select 0, %s7, %s5
  // Predicated region
  $region2: #{_lambda_.1} parent=0 // pred_check
    _
  $region3: #{_lambda_.1} parent=0 // pred_check_branch
    %10 = sbr.rel (0) target = $region5
  $region4: #{_lambda_.1} parent=0 // pred_region
    _
  $region5: #{_lambda_.1} parent=0 // pred_fallthru
    _
  // Predicated region
  $region6: #{_lambda_.1} parent=0 // pred_check
    _
  $region7: #{_lambda_.1} parent=0 // pred_check_branch
    %12 = sbr.rel (0) target = $region9
  $region8: #{_lambda_.1} parent=0 // pred_region
    _
  $region9: #{_lambda_.1} parent=0 // pred_fallthru
    _
  // Predicated region
  $region10: #{_lambda_.1} parent=0 // pred_check
    _
  $region11: #{_lambda_.1} parent=0 // pred_check_branch
    %14 = sbr.rel (0) target = $region13
  $region12: #{_lambda_.1} parent=0 // pred_region
    _
  $region13: #{_lambda_.1} parent=0 // pred_fallthru
    _
  // Predicated region
  $region14: #{_lambda_.1} parent=0 // pred_check
    _
  $region15: #{_lambda_.1} parent=0 // pred_check_branch
    %16 = sbr.rel (0) target = $region17
  $region16: #{_lambda_.1} parent=0 // pred_region
    _
  $region17: #{_lambda_.1} parent=0 // pred_fallthru
    _
  %v18 = vld [vmem:[%s0] sm:$0xf]
  %v19 = vld [vmem:[%s0 + $0x4] sm:$0xf]
  %v20 = vld [vmem:[%s0 + $0x8] sm:$0xf]
  %v21 = vld [vmem:[%s0 + $0xc] sm:$0xf]
  %v22 = vld [vmem:[%s0 + $0x10] sm:$0xf]
  %v23 = vld [vmem:[%s0 + $0x14] sm:$0xf]
  %v24 = vld [vmem:[%s0 + $0x18] sm:$0xf]
  %v25 = vld [vmem:[%s0 + $0x1c] sm:$0xf]
  %v26 = vld [vmem:[%s0 + $0x20] sm:$0xf]
  %v27 = vld [vmem:[%s0 + $0x24] sm:$0xf]
  %v28 = vld [vmem:[%s0 + $0x28] sm:$0xf]
  %v29 = vld [vmem:[%s0 + $0x2c] sm:$0xf]
  %v30 = vld [vmem:[%s0 + $0x30] sm:$0xf]
  %v31 = vld [vmem:[%s0 + $0x34] sm:$0xf]
  %v32 = vld [vmem:[%s0 + $0x38] sm:$0xf]
  %v33 = vld [vmem:[%s0 + $0x3c] sm:$0xf]
  %v34 = vld [vmem:[%s1] sm:$0xf]
  %v35 = vld [vmem:[%s1 + $0x4] sm:$0xf]
  %v36 = vld [vmem:[%s1 + $0x8] sm:$0xf]
  %v37 = vld [vmem:[%s1 + $0xc] sm:$0xf]
  %v38 = vld [vmem:[%s1 + $0x10] sm:$0xf]
  %v39 = vld [vmem:[%s1 + $0x14] sm:$0xf]
  %v40 = vld [vmem:[%s1 + $0x18] sm:$0xf]
  %v41 = vld [vmem:[%s1 + $0x1c] sm:$0xf]
  %v42 = vld [vmem:[%s1 + $0x20] sm:$0xf]
  %v43 = vld [vmem:[%s1 + $0x24] sm:$0xf]
  %v44 = vld [vmem:[%s1 + $0x28] sm:$0xf]
  %v45 = vld [vmem:[%s1 + $0x2c] sm:$0xf]
  %v46 = vld [vmem:[%s1 + $0x30] sm:$0xf]
  %v47 = vld [vmem:[%s1 + $0x34] sm:$0xf]
  %v48 = vld [vmem:[%s1 + $0x38] sm:$0xf]
  %v49 = vld [vmem:[%s1 + $0x3c] sm:$0xf]
  %v50 = vld [vmem:[%s2] sm:$0xf]
  %v51 = vld [vmem:[%s2 + $0x4] sm:$0xf]
  %v52 = vld [vmem:[%s2 + $0x8] sm:$0xf]
  %v53 = vld [vmem:[%s2 + $0xc] sm:$0xf]
  %v54 = vld [vmem:[%s2 + $0x10] sm:$0xf]
  %v55 = vld [vmem:[%s2 + $0x14] sm:$0xf]
  %v56 = vld [vmem:[%s2 + $0x18] sm:$0xf]
  %v57 = vld [vmem:[%s2 + $0x1c] sm:$0xf]
  %v58 = vld [vmem:[%s2 + $0x20] sm:$0xf]
  %v59 = vld [vmem:[%s2 + $0x24] sm:$0xf]
  %v60 = vld [vmem:[%s2 + $0x28] sm:$0xf]
  %v61 = vld [vmem:[%s2 + $0x2c] sm:$0xf]
  %v62 = vld [vmem:[%s2 + $0x30] sm:$0xf]
  %v63 = vld [vmem:[%s2 + $0x34] sm:$0xf]
  %v64 = vld [vmem:[%s2 + $0x38] sm:$0xf]
  %v65 = vld [vmem:[%s2 + $0x3c] sm:$0xf]
  %v82 = vunpack.c.l.b16 %v34
  %v83 = vunpack.c.l.b16 %v35
  %v84 = vunpack.c.l.b16 %v36
  %v85 = vunpack.c.l.b16 %v37
  %v86 = vunpack.c.l.b16 %v38
  %v87 = vunpack.c.l.b16 %v39
  %v88 = vunpack.c.l.b16 %v40
  %v89 = vunpack.c.l.b16 %v41
  %v90 = vunpack.c.l.b16 %v42
  %v91 = vunpack.c.l.b16 %v43
  %v92 = vunpack.c.l.b16 %v44
  %v93 = vunpack.c.l.b16 %v45
  %v94 = vunpack.c.l.b16 %v46
  %v95 = vunpack.c.l.b16 %v47
  %v96 = vunpack.c.l.b16 %v48
  %v97 = vunpack.c.l.b16 %v49
  %v98 = vpack.c.b16 %v83, %v82
  %v99 = vpack.c.b16 %v85, %v84
  %v100 = vpack.c.b16 %v87, %v86
  %v101 = vpack.c.b16 %v89, %v88
  %v102 = vpack.c.b16 %v91, %v90
  %v103 = vpack.c.b16 %v93, %v92
  %v104 = vpack.c.b16 %v95, %v94
  %v105 = vpack.c.b16 %v97, %v96
  %v130 = vunpack.c.l.b16 %v50
  %v131 = vunpack.c.l.b16 %v51
  %v132 = vunpack.c.l.b16 %v52
  %v133 = vunpack.c.l.b16 %v53
  %v134 = vunpack.c.l.b16 %v54
  %v135 = vunpack.c.l.b16 %v55
  %v136 = vunpack.c.l.b16 %v56
  %v137 = vunpack.c.l.b16 %v57
  %v138 = vunpack.c.l.b16 %v58
  %v139 = vunpack.c.l.b16 %v59
  %v140 = vunpack.c.l.b16 %v60
  %v141 = vunpack.c.l.b16 %v61
  %v142 = vunpack.c.l.b16 %v62
  %v143 = vunpack.c.l.b16 %v63
  %v144 = vunpack.c.l.b16 %v64
  %v145 = vunpack.c.l.b16 %v65
  %v146 = vpack.c.b16 %v131, %v130
  %v147 = vpack.c.b16 %v133, %v132
  %v148 = vpack.c.b16 %v135, %v134
  %v149 = vpack.c.b16 %v137, %v136
  %v150 = vpack.c.b16 %v139, %v138
  %v151 = vpack.c.b16 %v141, %v140
  %v152 = vpack.c.b16 %v143, %v142
  %v153 = vpack.c.b16 %v145, %v144
  %162 = vmatprep.subr.bf16.mxu0 0
  %163 = vmatpush1.bf16.msra.mxu0 %v146
  %164 = vmatprep.subr.bf16.mxu0 0
  %165 = vmatpush1.bf16.msra.mxu0 %v147
  %166 = vmatprep.subr.bf16.mxu0 0
  %167 = vmatpush1.bf16.msra.mxu0 %v148
  %168 = vmatprep.subr.bf16.mxu0 0
  %169 = vmatpush1.bf16.msra.mxu0 %v149
  %170 = vmatprep.subr.bf16.mxu0 0
  %171 = vmatpush1.bf16.msra.mxu0 %v150
  %172 = vmatprep.subr.bf16.mxu0 0
  %173 = vmatpush1.bf16.msra.mxu0 %v151
  %174 = vmatprep.subr.bf16.mxu0 0
  %175 = vmatpush1.bf16.msra.mxu0 %v152
  %176 = vmatprep.subr.bf16.mxu0 0
  %177 = vmatpush1.bf16.msra.mxu0 %v153
  %178 = vmatprep.subr.bf16.mxu0 0
  %179 = vmatpush1.bf16.msra.mxu0 0
  %180 = vmatprep.subr.bf16.mxu0 0
  %181 = vmatpush1.bf16.msra.mxu0 0
  %182 = vmatprep.subr.bf16.mxu0 0
  %183 = vmatpush1.bf16.msra.mxu0 0
  %184 = vmatprep.subr.bf16.mxu0 0
  %185 = vmatpush1.bf16.msra.mxu0 0
  %186 = vmatprep.subr.bf16.mxu0 0
  %187 = vmatpush1.bf16.msra.mxu0 0
  %188 = vmatprep.subr.bf16.mxu0 0
  %189 = vmatpush1.bf16.msra.mxu0 0
  %190 = vmatprep.subr.bf16.mxu0 0
  %191 = vmatpush1.bf16.msra.mxu0 0
  %192 = vmatprep.subr.bf16.mxu0 0
  %193 = vmatpush1.bf16.msra.mxu0 0
  %194 = vmatprep.mubr.bf16.mxu0 0
  %195 = vmatmul.mubr.bf16.gmra.mrb[0].mxu0 %v98
  %v196 = vpop.f32.mrb[0].mxu0
  %v197 = vadd.f32 0.0, %v196
  %v198 = vpop.f32.mrb[0].mxu0
  %v199 = vpop.f32.mrb[0].mxu0
  %v200 = vadd.f32 0.0, %v199
  %v201 = vpop.f32.mrb[0].mxu0
  %202 = vmatprep.mubr.bf16.mxu0 0
  %203 = vmatmul.mubr.bf16.gmra.mrb[0].mxu0 %v99
  %v204 = vpop.f32.mrb[0].mxu0
  %v205 = vadd.f32 0.0, %v204
  %v206 = vpop.f32.mrb[0].mxu0
  %v207 = vpop.f32.mrb[0].mxu0
  %v208 = vadd.f32 0.0, %v207
  %v209 = vpop.f32.mrb[0].mxu0
  %210 = vmatprep.mubr.bf16.mxu0 0
  %211 = vmatmul.mubr.bf16.gmra.mrb[0].mxu0 %v100
  %v212 = vpop.f32.mrb[0].mxu0
  %v213 = vadd.f32 0.0, %v212
  %v214 = vpop.f32.mrb[0].mxu0
  %v215 = vpop.f32.mrb[0].mxu0
  %v216 = vadd.f32 0.0, %v215
  %v217 = vpop.f32.mrb[0].mxu0
  %218 = vmatprep.mubr.bf16.mxu0 0
  %219 = vmatmul.mubr.bf16.gmra.mrb[0].mxu0 %v101
  %v220 = vpop.f32.mrb[0].mxu0
  %v221 = vadd.f32 0.0, %v220
  %v222 = vpop.f32.mrb[0].mxu0
  %v223 = vpop.f32.mrb[0].mxu0
  %v224 = vadd.f32 0.0, %v223
  %v225 = vpop.f32.mrb[0].mxu0
  %226 = vmatprep.mubr.bf16.mxu0 0
  %227 = vmatmul.mubr.bf16.gmra.mrb[0].mxu0 %v102
  %v228 = vpop.f32.mrb[0].mxu0
  %v229 = vadd.f32 0.0, %v228
  %v230 = vpop.f32.mrb[0].mxu0
  %v231 = vpop.f32.mrb[0].mxu0
  %v232 = vadd.f32 0.0, %v231
  %v233 = vpop.f32.mrb[0].mxu0
  %234 = vmatprep.mubr.bf16.mxu0 0
  %235 = vmatmul.mubr.bf16.gmra.mrb[0].mxu0 %v103
  %v236 = vpop.f32.mrb[0].mxu0
  %v237 = vadd.f32 0.0, %v236
  %v238 = vpop.f32.mrb[0].mxu0
  %v239 = vpop.f32.mrb[0].mxu0
  %v240 = vadd.f32 0.0, %v239
  %v241 = vpop.f32.mrb[0].mxu0
  %242 = vmatprep.mubr.bf16.mxu0 0
  %243 = vmatmul.mubr.bf16.gmra.mrb[0].mxu0 %v104
  %v244 = vpop.f32.mrb[0].mxu0
  %v245 = vadd.f32 0.0, %v244
  %v246 = vpop.f32.mrb[0].mxu0
  %v247 = vpop.f32.mrb[0].mxu0
  %v248 = vadd.f32 0.0, %v247
  %v249 = vpop.f32.mrb[0].mxu0
  %250 = vmatprep.mubr.bf16.mxu0 0
  %251 = vmatmul.mubr.bf16.gmra.mrb[0].mxu0 %v105
  %v252 = vpop.f32.mrb[0].mxu0
  %v253 = vadd.f32 0.0, %v252
  %v254 = vpop.f32.mrb[0].mxu0
  %v255 = vpop.f32.mrb[0].mxu0
  %v256 = vadd.f32 0.0, %v255
  %v257 = vpop.f32.mrb[0].mxu0
  %258 = vdwg.mxu0
  %v259 = vpack.c.bf16 %v200, %v197
  %v260 = vpack.c.bf16 %v208, %v205
  %v261 = vpack.c.bf16 %v216, %v213
  %v262 = vpack.c.bf16 %v224, %v221
  %v263 = vpack.c.bf16 %v232, %v229
  %v264 = vpack.c.bf16 %v240, %v237
  %v265 = vpack.c.bf16 %v248, %v245
  %v266 = vpack.c.bf16 %v256, %v253
  %v267 = vld [vmem:[%s3] sm:$0x1]
  %v269 = vlaneseq
  %v270 = vshrl.u32 %v269, 7
  %v271 = vsub.s32 0, %v270
  %v272 = vrot.slane %v267, %v271
  %v290 = vunpack.c.l.b16 %v18
  %v291 = vunpack.c.l.b16 %v19
  %v292 = vunpack.c.l.b16 %v20
  %v293 = vunpack.c.l.b16 %v21
  %v294 = vunpack.c.l.b16 %v22
  %v295 = vunpack.c.l.b16 %v23
  %v296 = vunpack.c.l.b16 %v24
  %v297 = vunpack.c.l.b16 %v25
  %v298 = vunpack.c.l.b16 %v26
  %v299 = vunpack.c.l.b16 %v27
  %v300 = vunpack.c.l.b16 %v28
  %v301 = vunpack.c.l.b16 %v29
  %v302 = vunpack.c.l.b16 %v30
  %v303 = vunpack.c.l.b16 %v31
  %v304 = vunpack.c.l.b16 %v32
  %v305 = vunpack.c.l.b16 %v33
  %v306 = vpack.c.b16 %v291, %v290
  %v307 = vpack.c.b16 %v293, %v292
  %v308 = vpack.c.b16 %v295, %v294
  %v309 = vpack.c.b16 %v297, %v296
  %v310 = vpack.c.b16 %v299, %v298
  %v311 = vpack.c.b16 %v301, %v300
  %v312 = vpack.c.b16 %v303, %v302
  %v313 = vpack.c.b16 %v305, %v304
  %322 = vmatprep.subr.bf16.mxu0 0
  %323 = vmatpush1.bf16.msra.mxu0 %v259
  %324 = vmatprep.subr.bf16.mxu0 0
  %325 = vmatpush1.bf16.msra.mxu0 %v260
  %326 = vmatprep.subr.bf16.mxu0 0
  %327 = vmatpush1.bf16.msra.mxu0 %v261
  %328 = vmatprep.subr.bf16.mxu0 0
  %329 = vmatpush1.bf16.msra.mxu0 %v262
  %330 = vmatprep.subr.bf16.mxu0 0
  %331 = vmatpush1.bf16.msra.mxu0 %v263
  %332 = vmatprep.subr.bf16.mxu0 0
  %333 = vmatpush1.bf16.msra.mxu0 %v264
  %334 = vmatprep.subr.bf16.mxu0 0
  %335 = vmatpush1.bf16.msra.mxu0 %v265
  %336 = vmatprep.subr.bf16.mxu0 0
  %337 = vmatpush1.bf16.msra.mxu0 %v266
  %338 = vmatprep.subr.bf16.mxu0 0
  %339 = vmatpush1.bf16.msra.mxu0 0
  %340 = vmatprep.subr.bf16.mxu0 0
  %341 = vmatpush1.bf16.msra.mxu0 0
  %342 = vmatprep.subr.bf16.mxu0 0
  %343 = vmatpush1.bf16.msra.mxu0 0
  %344 = vmatprep.subr.bf16.mxu0 0
  %345 = vmatpush1.bf16.msra.mxu0 0
  %346 = vmatprep.subr.bf16.mxu0 0
  %347 = vmatpush1.bf16.msra.mxu0 0
  %348 = vmatprep.subr.bf16.mxu0 0
  %349 = vmatpush1.bf16.msra.mxu0 0
  %350 = vmatprep.subr.bf16.mxu0 0
  %351 = vmatpush1.bf16.msra.mxu0 0
  %352 = vmatprep.subr.bf16.mxu0 0
  %353 = vmatpush1.bf16.msra.mxu0 0
  %354 = vmatprep.mubr.bf16.mxu0 0
  %355 = vmatmul.mubr.bf16.gmra.mrb[0].mxu0 %v306
  %v356 = vpop.f32.mrb[0].mxu0
  %v357 = vadd.f32 %v272, %v356
  %v358 = vpop.f32.mrb[0].mxu0
  %v359 = vpop.f32.mrb[0].mxu0
  %v360 = vadd.f32 %v272, %v359
  %v361 = vpop.f32.mrb[0].mxu0
  %362 = vmatprep.mubr.bf16.mxu0 0
  %363 = vmatmul.mubr.bf16.gmra.mrb[0].mxu0 %v307
  %v364 = vpop.f32.mrb[0].mxu0
  %v365 = vadd.f32 %v272, %v364
  %v366 = vpop.f32.mrb[0].mxu0
  %v367 = vpop.f32.mrb[0].mxu0
  %v368 = vadd.f32 %v272, %v367
  %v369 = vpop.f32.mrb[0].mxu0
  %370 = vmatprep.mubr.bf16.mxu0 0
  %371 = vmatmul.mubr.bf16.gmra.mrb[0].mxu0 %v308
  %v372 = vpop.f32.mrb[0].mxu0
  %v373 = vadd.f32 %v272, %v372
  %v374 = vpop.f32.mrb[0].mxu0
  %v375 = vpop.f32.mrb[0].mxu0
  %v376 = vadd.f32 %v272, %v375
  %v377 = vpop.f32.mrb[0].mxu0
  %378 = vmatprep.mubr.bf16.mxu0 0
  %379 = vmatmul.mubr.bf16.gmra.mrb[0].mxu0 %v309
  %v380 = vpop.f32.mrb[0].mxu0
  %v381 = vadd.f32 %v272, %v380
  %v382 = vpop.f32.mrb[0].mxu0
  %v383 = vpop.f32.mrb[0].mxu0
  %v384 = vadd.f32 %v272, %v383
  %v385 = vpop.f32.mrb[0].mxu0
  %386 = vmatprep.mubr.bf16.mxu0 0
  %387 = vmatmul.mubr.bf16.gmra.mrb[0].mxu0 %v310
  %v388 = vpop.f32.mrb[0].mxu0
  %v389 = vadd.f32 %v272, %v388
  %v390 = vpop.f32.mrb[0].mxu0
  %v391 = vpop.f32.mrb[0].mxu0
  %v392 = vadd.f32 %v272, %v391
  %v393 = vpop.f32.mrb[0].mxu0
  %394 = vmatprep.mubr.bf16.mxu0 0
  %395 = vmatmul.mubr.bf16.gmra.mrb[0].mxu0 %v311
  %v396 = vpop.f32.mrb[0].mxu0
  %v397 = vadd.f32 %v272, %v396
  %v398 = vpop.f32.mrb[0].mxu0
  %v399 = vpop.f32.mrb[0].mxu0
  %v400 = vadd.f32 %v272, %v399
  %v401 = vpop.f32.mrb[0].mxu0
  %402 = vmatprep.mubr.bf16.mxu0 0
  %403 = vmatmul.mubr.bf16.gmra.mrb[0].mxu0 %v312
  %v404 = vpop.f32.mrb[0].mxu0
  %v405 = vadd.f32 %v272, %v404
  %v406 = vpop.f32.mrb[0].mxu0
  %v407 = vpop.f32.mrb[0].mxu0
  %v408 = vadd.f32 %v272, %v407
  %v409 = vpop.f32.mrb[0].mxu0
  %410 = vmatprep.mubr.bf16.mxu0 0
  %411 = vmatmul.mubr.bf16.gmra.mrb[0].mxu0 %v313
  %v412 = vpop.f32.mrb[0].mxu0
  %v413 = vadd.f32 %v272, %v412
  %v414 = vpop.f32.mrb[0].mxu0
  %v415 = vpop.f32.mrb[0].mxu0
  %v416 = vadd.f32 %v272, %v415
  %v417 = vpop.f32.mrb[0].mxu0
  %418 = vdwg.mxu0
  %v419 = vmax.f32 %v357, 0.0
  %v420 = vmax.f32 %v360, 0.0
  %v421 = vmax.f32 %v365, 0.0
  %v422 = vmax.f32 %v368, 0.0
  %v423 = vmax.f32 %v373, 0.0
  %v424 = vmax.f32 %v376, 0.0
  %v425 = vmax.f32 %v381, 0.0
  %v426 = vmax.f32 %v384, 0.0
  %v427 = vmax.f32 %v389, 0.0
  %v428 = vmax.f32 %v392, 0.0
  %v429 = vmax.f32 %v397, 0.0
  %v430 = vmax.f32 %v400, 0.0
  %v431 = vmax.f32 %v405, 0.0
  %v432 = vmax.f32 %v408, 0.0
  %v433 = vmax.f32 %v413, 0.0
  %v434 = vmax.f32 %v416, 0.0
  %v435 = vpack.c.bf16 %v420, %v419
  %v436 = vpack.c.bf16 %v422, %v421
  %v437 = vpack.c.bf16 %v424, %v423
  %v438 = vpack.c.bf16 %v426, %v425
  %v439 = vpack.c.bf16 %v428, %v427
  %v440 = vpack.c.bf16 %v430, %v429
  %v441 = vpack.c.bf16 %v432, %v431
  %v442 = vpack.c.bf16 %v434, %v433
  %s443 = scalar_lea.vmem %s2, 64
  %v444 = vld [vmem:[%s443] sm:$0xf]
  %v445 = vld [vmem:[%s443 + $0x4] sm:$0xf]
  %v446 = vld [vmem:[%s443 + $0x8] sm:$0xf]
  %v447 = vld [vmem:[%s443 + $0xc] sm:$0xf]
  %v448 = vld [vmem:[%s443 + $0x10] sm:$0xf]
  %v449 = vld [vmem:[%s443 + $0x14] sm:$0xf]
  %v450 = vld [vmem:[%s443 + $0x18] sm:$0xf]
  %v451 = vld [vmem:[%s443 + $0x1c] sm:$0xf]
  %v452 = vld [vmem:[%s443 + $0x20] sm:$0xf]
  %v453 = vld [vmem:[%s443 + $0x24] sm:$0xf]
  %v454 = vld [vmem:[%s443 + $0x28] sm:$0xf]
  %v455 = vld [vmem:[%s443 + $0x2c] sm:$0xf]
  %v456 = vld [vmem:[%s443 + $0x30] sm:$0xf]
  %v457 = vld [vmem:[%s443 + $0x34] sm:$0xf]
  %v458 = vld [vmem:[%s443 + $0x38] sm:$0xf]
  %v459 = vld [vmem:[%s443 + $0x3c] sm:$0xf]
  %v476 = vunpack.c.l.b16 %v444
  %v477 = vunpack.c.l.b16 %v445
  %v478 = vunpack.c.l.b16 %v446
  %v479 = vunpack.c.l.b16 %v447
  %v480 = vunpack.c.l.b16 %v448
  %v481 = vunpack.c.l.b16 %v449
  %v482 = vunpack.c.l.b16 %v450
  %v483 = vunpack.c.l.b16 %v451
  %v484 = vunpack.c.l.b16 %v452
  %v485 = vunpack.c.l.b16 %v453
  %v486 = vunpack.c.l.b16 %v454
  %v487 = vunpack.c.l.b16 %v455
  %v488 = vunpack.c.l.b16 %v456
  %v489 = vunpack.c.l.b16 %v457
  %v490 = vunpack.c.l.b16 %v458
  %v491 = vunpack.c.l.b16 %v459
  %v492 = vpack.c.b16 %v477, %v476
  %v493 = vpack.c.b16 %v479, %v478
  %v494 = vpack.c.b16 %v481, %v480
  %v495 = vpack.c.b16 %v483, %v482
  %v496 = vpack.c.b16 %v485, %v484
  %v497 = vpack.c.b16 %v487, %v486
  %v498 = vpack.c.b16 %v489, %v488
  %v499 = vpack.c.b16 %v491, %v490
  %508 = vmatprep.subr.bf16.mxu0 0
  %509 = vmatpush1.bf16.msra.mxu0 %v492
  %510 = vmatprep.subr.bf16.mxu0 0
  %511 = vmatpush1.bf16.msra.mxu0 %v493
  %512 = vmatprep.subr.bf16.mxu0 0
  %513 = vmatpush1.bf16.msra.mxu0 %v494
  %514 = vmatprep.subr.bf16.mxu0 0
  %515 = vmatpush1.bf16.msra.mxu0 %v495
  %516 = vmatprep.subr.bf16.mxu0 0
  %517 = vmatpush1.bf16.msra.mxu0 %v496
  %518 = vmatprep.subr.bf16.mxu0 0
  %519 = vmatpush1.bf16.msra.mxu0 %v497
  %520 = vmatprep.subr.bf16.mxu0 0
  %521 = vmatpush1.bf16.msra.mxu0 %v498
  %522 = vmatprep.subr.bf16.mxu0 0
  %523 = vmatpush1.bf16.msra.mxu0 %v499
  %524 = vmatprep.subr.bf16.mxu0 0
  %525 = vmatpush1.bf16.msra.mxu0 0
  %526 = vmatprep.subr.bf16.mxu0 0
  %527 = vmatpush1.bf16.msra.mxu0 0
  %528 = vmatprep.subr.bf16.mxu0 0
  %529 = vmatpush1.bf16.msra.mxu0 0
  %530 = vmatprep.subr.bf16.mxu0 0
  %531 = vmatpush1.bf16.msra.mxu0 0
  %532 = vmatprep.subr.bf16.mxu0 0
  %533 = vmatpush1.bf16.msra.mxu0 0
  %534 = vmatprep.subr.bf16.mxu0 0
  %535 = vmatpush1.bf16.msra.mxu0 0
  %536 = vmatprep.subr.bf16.mxu0 0
  %537 = vmatpush1.bf16.msra.mxu0 0
  %538 = vmatprep.subr.bf16.mxu0 0
  %539 = vmatpush1.bf16.msra.mxu0 0
  %540 = vmatprep.mubr.bf16.mxu0 0
  %541 = vmatmul.mubr.bf16.gmra.mrb[0].mxu0 %v435
  %v542 = vpop.f32.mrb[0].mxu0
  %v543 = vadd.f32 0.0, %v542
  %v544 = vpop.f32.mrb[0].mxu0
  %v545 = vpop.f32.mrb[0].mxu0
  %v546 = vadd.f32 0.0, %v545
  %v547 = vpop.f32.mrb[0].mxu0
  %548 = vmatprep.mubr.bf16.mxu0 0
  %549 = vmatmul.mubr.bf16.gmra.mrb[0].mxu0 %v436
  %v550 = vpop.f32.mrb[0].mxu0
  %v551 = vadd.f32 0.0, %v550
  %v552 = vpop.f32.mrb[0].mxu0
  %v553 = vpop.f32.mrb[0].mxu0
  %v554 = vadd.f32 0.0, %v553
  %v555 = vpop.f32.mrb[0].mxu0
  %556 = vmatprep.mubr.bf16.mxu0 0
  %557 = vmatmul.mubr.bf16.gmra.mrb[0].mxu0 %v437
  %v558 = vpop.f32.mrb[0].mxu0
  %v559 = vadd.f32 0.0, %v558
  %v560 = vpop.f32.mrb[0].mxu0
  %v561 = vpop.f32.mrb[0].mxu0
  %v562 = vadd.f32 0.0, %v561
  %v563 = vpop.f32.mrb[0].mxu0
  %564 = vmatprep.mubr.bf16.mxu0 0
  %565 = vmatmul.mubr.bf16.gmra.mrb[0].mxu0 %v438
  %v566 = vpop.f32.mrb[0].mxu0
  %v567 = vadd.f32 0.0, %v566
  %v568 = vpop.f32.mrb[0].mxu0
  %v569 = vpop.f32.mrb[0].mxu0
  %v570 = vadd.f32 0.0, %v569
  %v571 = vpop.f32.mrb[0].mxu0
  %572 = vmatprep.mubr.bf16.mxu0 0
  %573 = vmatmul.mubr.bf16.gmra.mrb[0].mxu0 %v439
  %v574 = vpop.f32.mrb[0].mxu0
  %v575 = vadd.f32 0.0, %v574
  %v576 = vpop.f32.mrb[0].mxu0
  %v577 = vpop.f32.mrb[0].mxu0
  %v578 = vadd.f32 0.0, %v577
  %v579 = vpop.f32.mrb[0].mxu0
  %580 = vmatprep.mubr.bf16.mxu0 0
  %581 = vmatmul.mubr.bf16.gmra.mrb[0].mxu0 %v440
  %v582 = vpop.f32.mrb[0].mxu0
  %v583 = vadd.f32 0.0, %v582
  %v584 = vpop.f32.mrb[0].mxu0
  %v585 = vpop.f32.mrb[0].mxu0
  %v586 = vadd.f32 0.0, %v585
  %v587 = vpop.f32.mrb[0].mxu0
  %588 = vmatprep.mubr.bf16.mxu0 0
  %589 = vmatmul.mubr.bf16.gmra.mrb[0].mxu0 %v441
  %v590 = vpop.f32.mrb[0].mxu0
  %v591 = vadd.f32 0.0, %v590
  %v592 = vpop.f32.mrb[0].mxu0
  %v593 = vpop.f32.mrb[0].mxu0
  %v594 = vadd.f32 0.0, %v593
  %v595 = vpop.f32.mrb[0].mxu0
  %596 = vmatprep.mubr.bf16.mxu0 0
  %597 = vmatmul.mubr.bf16.gmra.mrb[0].mxu0 %v442
  %v598 = vpop.f32.mrb[0].mxu0
  %v599 = vadd.f32 0.0, %v598
  %v600 = vpop.f32.mrb[0].mxu0
  %v601 = vpop.f32.mrb[0].mxu0
  %v602 = vadd.f32 0.0, %v601
  %v603 = vpop.f32.mrb[0].mxu0
  %604 = vdwg.mxu0
  %v605 = vpack.c.bf16 %v546, %v543
  %v606 = vpack.c.bf16 %v554, %v551
  %v607 = vpack.c.bf16 %v562, %v559
  %v608 = vpack.c.bf16 %v570, %v567
  %v609 = vpack.c.bf16 %v578, %v575
  %v610 = vpack.c.bf16 %v586, %v583
  %v611 = vpack.c.bf16 %v594, %v591
  %v612 = vpack.c.bf16 %v602, %v599
  %s613 = scalar_lea.vmem %s3, 1
  %v614 = vld [vmem:[%s613] sm:$0x1]
  %v616 = vlaneseq
  %v617 = vshrl.u32 %v616, 7
  %v618 = vsub.s32 0, %v617
  %v619 = vrot.slane %v614, %v618
  %621 = vmatprep.subr.bf16.mxu0 0
  %622 = vmatpush1.bf16.msra.mxu0 %v605
  %623 = vmatprep.subr.bf16.mxu0 0
  %624 = vmatpush1.bf16.msra.mxu0 %v606
  %625 = vmatprep.subr.bf16.mxu0 0
  %626 = vmatpush1.bf16.msra.mxu0 %v607
  %627 = vmatprep.subr.bf16.mxu0 0
  %628 = vmatpush1.bf16.msra.mxu0 %v608
  %629 = vmatprep.subr.bf16.mxu0 0
  %630 = vmatpush1.bf16.msra.mxu0 %v609
  %631 = vmatprep.subr.bf16.mxu0 0
  %632 = vmatpush1.bf16.msra.mxu0 %v610
  %633 = vmatprep.subr.bf16.mxu0 0
  %634 = vmatpush1.bf16.msra.mxu0 %v611
  %635 = vmatprep.subr.bf16.mxu0 0
  %636 = vmatpush1.bf16.msra.mxu0 %v612
  %637 = vmatprep.subr.bf16.mxu0 0
  %638 = vmatpush1.bf16.msra.mxu0 0
  %639 = vmatprep.subr.bf16.mxu0 0
  %640 = vmatpush1.bf16.msra.mxu0 0
  %641 = vmatprep.subr.bf16.mxu0 0
  %642 = vmatpush1.bf16.msra.mxu0 0
  %643 = vmatprep.subr.bf16.mxu0 0
  %644 = vmatpush1.bf16.msra.mxu0 0
  %645 = vmatprep.subr.bf16.mxu0 0
  %646 = vmatpush1.bf16.msra.mxu0 0
  %647 = vmatprep.subr.bf16.mxu0 0
  %648 = vmatpush1.bf16.msra.mxu0 0
  %649 = vmatprep.subr.bf16.mxu0 0
  %650 = vmatpush1.bf16.msra.mxu0 0
  %651 = vmatprep.subr.bf16.mxu0 0
  %652 = vmatpush1.bf16.msra.mxu0 0
  %653 = vmatprep.mubr.bf16.mxu0 0
  %654 = vmatmul.mubr.bf16.gmra.mrb[0].mxu0 %v306
  %v655 = vpop.f32.mrb[0].mxu0
  %v656 = vadd.f32 %v619, %v655
  %v657 = vpop.f32.mrb[0].mxu0
  %v658 = vpop.f32.mrb[0].mxu0
  %v659 = vadd.f32 %v619, %v658
  %v660 = vpop.f32.mrb[0].mxu0
  %661 = vmatprep.mubr.bf16.mxu0 0
  %662 = vmatmul.mubr.bf16.gmra.mrb[0].mxu0 %v307
  %v663 = vpop.f32.mrb[0].mxu0
  %v664 = vadd.f32 %v619, %v663
  %v665 = vpop.f32.mrb[0].mxu0
  %v666 = vpop.f32.mrb[0].mxu0
  %v667 = vadd.f32 %v619, %v666
  %v668 = vpop.f32.mrb[0].mxu0
  %669 = vmatprep.mubr.bf16.mxu0 0
  %670 = vmatmul.mubr.bf16.gmra.mrb[0].mxu0 %v308
  %v671 = vpop.f32.mrb[0].mxu0
  %v672 = vadd.f32 %v619, %v671
  %v673 = vpop.f32.mrb[0].mxu0
  %v674 = vpop.f32.mrb[0].mxu0
  %v675 = vadd.f32 %v619, %v674
  %v676 = vpop.f32.mrb[0].mxu0
  %677 = vmatprep.mubr.bf16.mxu0 0
  %678 = vmatmul.mubr.bf16.gmra.mrb[0].mxu0 %v309
  %v679 = vpop.f32.mrb[0].mxu0
  %v680 = vadd.f32 %v619, %v679
  %v681 = vpop.f32.mrb[0].mxu0
  %v682 = vpop.f32.mrb[0].mxu0
  %v683 = vadd.f32 %v619, %v682
  %v684 = vpop.f32.mrb[0].mxu0
  %685 = vmatprep.mubr.bf16.mxu0 0
  %686 = vmatmul.mubr.bf16.gmra.mrb[0].mxu0 %v310
  %v687 = vpop.f32.mrb[0].mxu0
  %v688 = vadd.f32 %v619, %v687
  %v689 = vpop.f32.mrb[0].mxu0
  %v690 = vpop.f32.mrb[0].mxu0
  %v691 = vadd.f32 %v619, %v690
  %v692 = vpop.f32.mrb[0].mxu0
  %693 = vmatprep.mubr.bf16.mxu0 0
  %694 = vmatmul.mubr.bf16.gmra.mrb[0].mxu0 %v311
  %v695 = vpop.f32.mrb[0].mxu0
  %v696 = vadd.f32 %v619, %v695
  %v697 = vpop.f32.mrb[0].mxu0
  %v698 = vpop.f32.mrb[0].mxu0
  %v699 = vadd.f32 %v619, %v698
  %v700 = vpop.f32.mrb[0].mxu0
  %701 = vmatprep.mubr.bf16.mxu0 0
  %702 = vmatmul.mubr.bf16.gmra.mrb[0].mxu0 %v312
  %v703 = vpop.f32.mrb[0].mxu0
  %v704 = vadd.f32 %v619, %v703
  %v705 = vpop.f32.mrb[0].mxu0
  %v706 = vpop.f32.mrb[0].mxu0
  %v707 = vadd.f32 %v619, %v706
  %v708 = vpop.f32.mrb[0].mxu0
  %709 = vmatprep.mubr.bf16.mxu0 0
  %710 = vmatmul.mubr.bf16.gmra.mrb[0].mxu0 %v313
  %v711 = vpop.f32.mrb[0].mxu0
  %v712 = vadd.f32 %v619, %v711
  %v713 = vpop.f32.mrb[0].mxu0
  %v714 = vpop.f32.mrb[0].mxu0
  %v715 = vadd.f32 %v619, %v714
  %v716 = vpop.f32.mrb[0].mxu0
  %717 = vdwg.mxu0
  %v718 = vmax.f32 %v656, 0.0
  %v719 = vmax.f32 %v659, 0.0
  %v720 = vmax.f32 %v664, 0.0
  %v721 = vmax.f32 %v667, 0.0
  %v722 = vmax.f32 %v672, 0.0
  %v723 = vmax.f32 %v675, 0.0
  %v724 = vmax.f32 %v680, 0.0
  %v725 = vmax.f32 %v683, 0.0
  %v726 = vmax.f32 %v688, 0.0
  %v727 = vmax.f32 %v691, 0.0
  %v728 = vmax.f32 %v696, 0.0
  %v729 = vmax.f32 %v699, 0.0
  %v730 = vmax.f32 %v704, 0.0
  %v731 = vmax.f32 %v707, 0.0
  %v732 = vmax.f32 %v712, 0.0
  %v733 = vmax.f32 %v715, 0.0
  %v734 = vpack.c.bf16 %v719, %v718
  %v735 = vpack.c.bf16 %v721, %v720
  %v736 = vpack.c.bf16 %v723, %v722
  %v737 = vpack.c.bf16 %v725, %v724
  %v738 = vpack.c.bf16 %v727, %v726
  %v739 = vpack.c.bf16 %v729, %v728
  %v740 = vpack.c.bf16 %v731, %v730
  %v741 = vpack.c.bf16 %v733, %v732
  %s742 = scalar_lea.vmem %s2, 128
  %v743 = vld [vmem:[%s742] sm:$0xf]
  %v744 = vld [vmem:[%s742 + $0x4] sm:$0xf]
  %v745 = vld [vmem:[%s742 + $0x8] sm:$0xf]
  %v746 = vld [vmem:[%s742 + $0xc] sm:$0xf]
  %v747 = vld [vmem:[%s742 + $0x10] sm:$0xf]
  %v748 = vld [vmem:[%s742 + $0x14] sm:$0xf]
  %v749 = vld [vmem:[%s742 + $0x18] sm:$0xf]
  %v750 = vld [vmem:[%s742 + $0x1c] sm:$0xf]
  %v751 = vld [vmem:[%s742 + $0x20] sm:$0xf]
  %v752 = vld [vmem:[%s742 + $0x24] sm:$0xf]
  %v753 = vld [vmem:[%s742 + $0x28] sm:$0xf]
  %v754 = vld [vmem:[%s742 + $0x2c] sm:$0xf]
  %v755 = vld [vmem:[%s742 + $0x30] sm:$0xf]
  %v756 = vld [vmem:[%s742 + $0x34] sm:$0xf]
  %v757 = vld [vmem:[%s742 + $0x38] sm:$0xf]
  %v758 = vld [vmem:[%s742 + $0x3c] sm:$0xf]
  %v775 = vunpack.c.l.b16 %v743
  %v776 = vunpack.c.l.b16 %v744
  %v777 = vunpack.c.l.b16 %v745
  %v778 = vunpack.c.l.b16 %v746
  %v779 = vunpack.c.l.b16 %v747
  %v780 = vunpack.c.l.b16 %v748
  %v781 = vunpack.c.l.b16 %v749
  %v782 = vunpack.c.l.b16 %v750
  %v783 = vunpack.c.l.b16 %v751
  %v784 = vunpack.c.l.b16 %v752
  %v785 = vunpack.c.l.b16 %v753
  %v786 = vunpack.c.l.b16 %v754
  %v787 = vunpack.c.l.b16 %v755
  %v788 = vunpack.c.l.b16 %v756
  %v789 = vunpack.c.l.b16 %v757
  %v790 = vunpack.c.l.b16 %v758
  %v791 = vpack.c.b16 %v776, %v775
  %v792 = vpack.c.b16 %v778, %v777
  %v793 = vpack.c.b16 %v780, %v779
  %v794 = vpack.c.b16 %v782, %v781
  %v795 = vpack.c.b16 %v784, %v783
  %v796 = vpack.c.b16 %v786, %v785
  %v797 = vpack.c.b16 %v788, %v787
  %v798 = vpack.c.b16 %v790, %v789
  %807 = vmatprep.subr.bf16.mxu0 0
  %808 = vmatpush1.bf16.msra.mxu0 %v791
  %809 = vmatprep.subr.bf16.mxu0 0
  %810 = vmatpush1.bf16.msra.mxu0 %v792
  %811 = vmatprep.subr.bf16.mxu0 0
  %812 = vmatpush1.bf16.msra.mxu0 %v793
  %813 = vmatprep.subr.bf16.mxu0 0
  %814 = vmatpush1.bf16.msra.mxu0 %v794
  %815 = vmatprep.subr.bf16.mxu0 0
  %816 = vmatpush1.bf16.msra.mxu0 %v795
  %817 = vmatprep.subr.bf16.mxu0 0
  %818 = vmatpush1.bf16.msra.mxu0 %v796
  %819 = vmatprep.subr.bf16.mxu0 0
  %820 = vmatpush1.bf16.msra.mxu0 %v797
  %821 = vmatprep.subr.bf16.mxu0 0
  %822 = vmatpush1.bf16.msra.mxu0 %v798
  %823 = vmatprep.subr.bf16.mxu0 0
  %824 = vmatpush1.bf16.msra.mxu0 0
  %825 = vmatprep.subr.bf16.mxu0 0
  %826 = vmatpush1.bf16.msra.mxu0 0
  %827 = vmatprep.subr.bf16.mxu0 0
  %828 = vmatpush1.bf16.msra.mxu0 0
  %829 = vmatprep.subr.bf16.mxu0 0
  %830 = vmatpush1.bf16.msra.mxu0 0
  %831 = vmatprep.subr.bf16.mxu0 0
  %832 = vmatpush1.bf16.msra.mxu0 0
  %833 = vmatprep.subr.bf16.mxu0 0
  %834 = vmatpush1.bf16.msra.mxu0 0
  %835 = vmatprep.subr.bf16.mxu0 0
  %836 = vmatpush1.bf16.msra.mxu0 0
  %837 = vmatprep.subr.bf16.mxu0 0
  %838 = vmatpush1.bf16.msra.mxu0 0
  %839 = vmatprep.mubr.bf16.mxu0 0
  %840 = vmatmul.mubr.bf16.gmra.mrb[0].mxu0 %v734
  %v841 = vpop.f32.mrb[0].mxu0
  %v842 = vadd.f32 0.0, %v841
  %v843 = vpop.f32.mrb[0].mxu0
  %v844 = vpop.f32.mrb[0].mxu0
  %v845 = vadd.f32 0.0, %v844
  %v846 = vpop.f32.mrb[0].mxu0
  %847 = vmatprep.mubr.bf16.mxu0 0
  %848 = vmatmul.mubr.bf16.gmra.mrb[0].mxu0 %v735
  %v849 = vpop.f32.mrb[0].mxu0
  %v850 = vadd.f32 0.0, %v849
  %v851 = vpop.f32.mrb[0].mxu0
  %v852 = vpop.f32.mrb[0].mxu0
  %v853 = vadd.f32 0.0, %v852
  %v854 = vpop.f32.mrb[0].mxu0
  %855 = vmatprep.mubr.bf16.mxu0 0
  %856 = vmatmul.mubr.bf16.gmra.mrb[0].mxu0 %v736
  %v857 = vpop.f32.mrb[0].mxu0
  %v858 = vadd.f32 0.0, %v857
  %v859 = vpop.f32.mrb[0].mxu0
  %v860 = vpop.f32.mrb[0].mxu0
  %v861 = vadd.f32 0.0, %v860
  %v862 = vpop.f32.mrb[0].mxu0
  %863 = vmatprep.mubr.bf16.mxu0 0
  %864 = vmatmul.mubr.bf16.gmra.mrb[0].mxu0 %v737
  %v865 = vpop.f32.mrb[0].mxu0
  %v866 = vadd.f32 0.0, %v865
  %v867 = vpop.f32.mrb[0].mxu0
  %v868 = vpop.f32.mrb[0].mxu0
  %v869 = vadd.f32 0.0, %v868
  %v870 = vpop.f32.mrb[0].mxu0
  %871 = vmatprep.mubr.bf16.mxu0 0
  %872 = vmatmul.mubr.bf16.gmra.mrb[0].mxu0 %v738
  %v873 = vpop.f32.mrb[0].mxu0
  %v874 = vadd.f32 0.0, %v873
  %v875 = vpop.f32.mrb[0].mxu0
  %v876 = vpop.f32.mrb[0].mxu0
  %v877 = vadd.f32 0.0, %v876
  %v878 = vpop.f32.mrb[0].mxu0
  %879 = vmatprep.mubr.bf16.mxu0 0
  %880 = vmatmul.mubr.bf16.gmra.mrb[0].mxu0 %v739
  %v881 = vpop.f32.mrb[0].mxu0
  %v882 = vadd.f32 0.0, %v881
  %v883 = vpop.f32.mrb[0].mxu0
  %v884 = vpop.f32.mrb[0].mxu0
  %v885 = vadd.f32 0.0, %v884
  %v886 = vpop.f32.mrb[0].mxu0
  %887 = vmatprep.mubr.bf16.mxu0 0
  %888 = vmatmul.mubr.bf16.gmra.mrb[0].mxu0 %v740
  %v889 = vpop.f32.mrb[0].mxu0
  %v890 = vadd.f32 0.0, %v889
  %v891 = vpop.f32.mrb[0].mxu0
  %v892 = vpop.f32.mrb[0].mxu0
  %v893 = vadd.f32 0.0, %v892
  %v894 = vpop.f32.mrb[0].mxu0
  %895 = vmatprep.mubr.bf16.mxu0 0
  %896 = vmatmul.mubr.bf16.gmra.mrb[0].mxu0 %v741
  %v897 = vpop.f32.mrb[0].mxu0
  %v898 = vadd.f32 0.0, %v897
  %v899 = vpop.f32.mrb[0].mxu0
  %v900 = vpop.f32.mrb[0].mxu0
  %v901 = vadd.f32 0.0, %v900
  %v902 = vpop.f32.mrb[0].mxu0
  %903 = vdwg.mxu0
  %v904 = vpack.c.bf16 %v845, %v842
  %v905 = vpack.c.bf16 %v853, %v850
  %v906 = vpack.c.bf16 %v861, %v858
  %v907 = vpack.c.bf16 %v869, %v866
  %v908 = vpack.c.bf16 %v877, %v874
  %v909 = vpack.c.bf16 %v885, %v882
  %v910 = vpack.c.bf16 %v893, %v890
  %v911 = vpack.c.bf16 %v901, %v898
  %s912 = scalar_lea.vmem %s3, 2
  %v913 = vld [vmem:[%s912] sm:$0x1]
  %v915 = vlaneseq
  %v916 = vshrl.u32 %v915, 7
  %v917 = vsub.s32 0, %v916
  %v918 = vrot.slane %v913, %v917
  %920 = vmatprep.subr.bf16.mxu0 0
  %921 = vmatpush1.bf16.msra.mxu0 %v904
  %922 = vmatprep.subr.bf16.mxu0 0
  %923 = vmatpush1.bf16.msra.mxu0 %v905
  %924 = vmatprep.subr.bf16.mxu0 0
  %925 = vmatpush1.bf16.msra.mxu0 %v906
  %926 = vmatprep.subr.bf16.mxu0 0
  %927 = vmatpush1.bf16.msra.mxu0 %v907
  %928 = vmatprep.subr.bf16.mxu0 0
  %929 = vmatpush1.bf16.msra.mxu0 %v908
  %930 = vmatprep.subr.bf16.mxu0 0
  %931 = vmatpush1.bf16.msra.mxu0 %v909
  %932 = vmatprep.subr.bf16.mxu0 0
  %933 = vmatpush1.bf16.msra.mxu0 %v910
  %934 = vmatprep.subr.bf16.mxu0 0
  %935 = vmatpush1.bf16.msra.mxu0 %v911
  %936 = vmatprep.subr.bf16.mxu0 0
  %937 = vmatpush1.bf16.msra.mxu0 0
  %938 = vmatprep.subr.bf16.mxu0 0
  %939 = vmatpush1.bf16.msra.mxu0 0
  %940 = vmatprep.subr.bf16.mxu0 0
  %941 = vmatpush1.bf16.msra.mxu0 0
  %942 = vmatprep.subr.bf16.mxu0 0
  %943 = vmatpush1.bf16.msra.mxu0 0
  %944 = vmatprep.subr.bf16.mxu0 0
  %945 = vmatpush1.bf16.msra.mxu0 0
  %946 = vmatprep.subr.bf16.mxu0 0
  %947 = vmatpush1.bf16.msra.mxu0 0
  %948 = vmatprep.subr.bf16.mxu0 0
  %949 = vmatpush1.bf16.msra.mxu0 0
  %950 = vmatprep.subr.bf16.mxu0 0
  %951 = vmatpush1.bf16.msra.mxu0 0
  %952 = vmatprep.mubr.bf16.mxu0 0
  %953 = vmatmul.mubr.bf16.gmra.mrb[0].mxu0 %v306
  %v954 = vpop.f32.mrb[0].mxu0
  %v955 = vadd.f32 %v918, %v954
  %v956 = vpop.f32.mrb[0].mxu0
  %v957 = vpop.f32.mrb[0].mxu0
  %v958 = vadd.f32 %v918, %v957
  %v959 = vpop.f32.mrb[0].mxu0
  %960 = vmatprep.mubr.bf16.mxu0 0
  %961 = vmatmul.mubr.bf16.gmra.mrb[0].mxu0 %v307
  %v962 = vpop.f32.mrb[0].mxu0
  %v963 = vadd.f32 %v918, %v962
  %v964 = vpop.f32.mrb[0].mxu0
  %v965 = vpop.f32.mrb[0].mxu0
  %v966 = vadd.f32 %v918, %v965
  %v967 = vpop.f32.mrb[0].mxu0
  %968 = vmatprep.mubr.bf16.mxu0 0
  %969 = vmatmul.mubr.bf16.gmra.mrb[0].mxu0 %v308
  %v970 = vpop.f32.mrb[0].mxu0
  %v971 = vadd.f32 %v918, %v970
  %v972 = vpop.f32.mrb[0].mxu0
  %v973 = vpop.f32.mrb[0].mxu0
  %v974 = vadd.f32 %v918, %v973
  %v975 = vpop.f32.mrb[0].mxu0
  %976 = vmatprep.mubr.bf16.mxu0 0
  %977 = vmatmul.mubr.bf16.gmra.mrb[0].mxu0 %v309
  %v978 = vpop.f32.mrb[0].mxu0
  %v979 = vadd.f32 %v918, %v978
  %v980 = vpop.f32.mrb[0].mxu0
  %v981 = vpop.f32.mrb[0].mxu0
  %v982 = vadd.f32 %v918, %v981
  %v983 = vpop.f32.mrb[0].mxu0
  %984 = vmatprep.mubr.bf16.mxu0 0
  %985 = vmatmul.mubr.bf16.gmra.mrb[0].mxu0 %v310
  %v986 = vpop.f32.mrb[0].mxu0
  %v987 = vadd.f32 %v918, %v986
  %v988 = vpop.f32.mrb[0].mxu0
  %v989 = vpop.f32.mrb[0].mxu0
  %v990 = vadd.f32 %v918, %v989
  %v991 = vpop.f32.mrb[0].mxu0
  %992 = vmatprep.mubr.bf16.mxu0 0
  %993 = vmatmul.mubr.bf16.gmra.mrb[0].mxu0 %v311
  %v994 = vpop.f32.mrb[0].mxu0
  %v995 = vadd.f32 %v918, %v994
  %v996 = vpop.f32.mrb[0].mxu0
  %v997 = vpop.f32.mrb[0].mxu0
  %v998 = vadd.f32 %v918, %v997
  %v999 = vpop.f32.mrb[0].mxu0
  %1000 = vmatprep.mubr.bf16.mxu0 0
  %1001 = vmatmul.mubr.bf16.gmra.mrb[0].mxu0 %v312
  %v1002 = vpop.f32.mrb[0].mxu0
  %v1003 = vadd.f32 %v918, %v1002
  %v1004 = vpop.f32.mrb[0].mxu0
  %v1005 = vpop.f32.mrb[0].mxu0
  %v1006 = vadd.f32 %v918, %v1005
  %v1007 = vpop.f32.mrb[0].mxu0
  %1008 = vmatprep.mubr.bf16.mxu0 0
  %1009 = vmatmul.mubr.bf16.gmra.mrb[0].mxu0 %v313
  %v1010 = vpop.f32.mrb[0].mxu0
  %v1011 = vadd.f32 %v918, %v1010
  %v1012 = vpop.f32.mrb[0].mxu0
  %v1013 = vpop.f32.mrb[0].mxu0
  %v1014 = vadd.f32 %v918, %v1013
  %v1015 = vpop.f32.mrb[0].mxu0
  %1016 = vdwg.mxu0
  %v1017 = vmax.f32 %v955, 0.0
  %v1018 = vmax.f32 %v958, 0.0
  %v1019 = vmax.f32 %v963, 0.0
  %v1020 = vmax.f32 %v966, 0.0
  %v1021 = vmax.f32 %v971, 0.0
  %v1022 = vmax.f32 %v974, 0.0
  %v1023 = vmax.f32 %v979, 0.0
  %v1024 = vmax.f32 %v982, 0.0
  %v1025 = vmax.f32 %v987, 0.0
  %v1026 = vmax.f32 %v990, 0.0
  %v1027 = vmax.f32 %v995, 0.0
  %v1028 = vmax.f32 %v998, 0.0
  %v1029 = vmax.f32 %v1003, 0.0
  %v1030 = vmax.f32 %v1006, 0.0
  %v1031 = vmax.f32 %v1011, 0.0
  %v1032 = vmax.f32 %v1014, 0.0
  %1033 = vst [vmem:[%s4] sm:$0xff] %v1017
  %1034 = vst [vmem:[%s4 + $0x8] sm:$0xff] %v1018
  %1035 = vst [vmem:[%s4 + $0x10] sm:$0xff] %v1019
  %1036 = vst [vmem:[%s4 + $0x18] sm:$0xff] %v1020
  %1037 = vst [vmem:[%s4 + $0x20] sm:$0xff] %v1021
  %1038 = vst [vmem:[%s4 + $0x28] sm:$0xff] %v1022
  %1039 = vst [vmem:[%s4 + $0x30] sm:$0xff] %v1023
  %1040 = vst [vmem:[%s4 + $0x38] sm:$0xff] %v1024
  %1041 = vst [vmem:[%s4 + $0x40] sm:$0xff] %v1025
  %1042 = vst [vmem:[%s4 + $0x48] sm:$0xff] %v1026
  %1043 = vst [vmem:[%s4 + $0x50] sm:$0xff] %v1027
  %1044 = vst [vmem:[%s4 + $0x58] sm:$0xff] %v1028
  %1045 = vst [vmem:[%s4 + $0x60] sm:$0xff] %v1029
  %1046 = vst [vmem:[%s4 + $0x68] sm:$0xff] %v1030
  %1047 = vst [vmem:[%s4 + $0x70] sm:$0xff] %v1031
  %1048 = vst [vmem:[%s4 + $0x78] sm:$0xff] %v1032
  // Predicated region
  $region18: #{_lambda_.1} parent=0 // pred_check
    _
  $region19: #{_lambda_.1} parent=0 // pred_check_branch
    %1050 = sbr.rel (0) target = $region21
  $region20: #{_lambda_.1} parent=0 // pred_region
    _
  $region21: #{_lambda_.1} parent=0 // pred_fallthru
    _
  // Predicated region
  $region22: #{_lambda_.1} parent=0 // pred_check
    _
  $region23: #{_lambda_.1} parent=0 // pred_check_branch
    %1052 = sbr.rel (0) target = $region25
  $region24: #{_lambda_.1} parent=0 // pred_region
    _
  $region25: #{_lambda_.1} parent=0 // pred_fallthru
    _

</llo_original>
